<compile_context>
chip_gen: v7x
topology: tpu7x:2x2x1
jax: 0.10.0
libtpu: 0.0.40
codegen_flags: <defaults>
</compile_context>

<pallas_src>
import functools

import jax
import jax.numpy as jnp
from jax.experimental import pallas as pl
from jax.experimental.pallas import tpu as pltpu


# ---------------------------------------------------------------------------
# helpers
# ---------------------------------------------------------------------------
def _round_up(x, m):
    return ((x + m - 1) // m) * m


def _x_block_spec(tm, k_pad, grid_steps):
    """x-stream BlockSpec; deeper pipelining when there are enough grid steps
    (helps most on v5e's lower HBM bandwidth).  Falls back gracefully if the
    installed JAX does not accept pipeline_mode."""
    idx = lambda i: (i, 0)
    if grid_steps >= 3:
        try:
            return pl.BlockSpec((tm, k_pad), idx, pipeline_mode=pl.Buffered(3))
        except TypeError:
            pass
    return pl.BlockSpec((tm, k_pad), idx)


# ---------------------------------------------------------------------------
# Fused MLP kernel: all Linear(+ReLU) layers in one kernel invocation.
#   refs = (x, w0, b0, w1, b1, ..., w_out, b_out, logits_out[, features_out])
#   wi is pre-transposed to (in, out) bf16; bi is (1, out) f32; everything is
#   padded to lane-dense widths outside the kernel.
# ---------------------------------------------------------------------------
def _fused_mlp_kernel(*refs, num_hidden, with_features):
    n_lin = num_hidden + 1
    x_ref = refs[0]
    w_refs = [refs[1 + 2 * i] for i in range(n_lin)]
    b_refs = [refs[2 + 2 * i] for i in range(n_lin)]
    out_ref = refs[1 + 2 * n_lin]                      # logits (padded, f32)
    feat_ref = refs[2 + 2 * n_lin] if with_features else None

    compute_dtype = w_refs[0].dtype                    # bf16 MXU operands
    h = x_ref[...].astype(compute_dtype)
    feats_f32 = h.astype(jnp.float32)
    for i in range(num_hidden):
        acc = jnp.dot(h, w_refs[i][...], preferred_element_type=jnp.float32)
        acc = jnp.maximum(acc + b_refs[i][...], 0.0)   # bias + ReLU in f32
        feats_f32 = acc
        h = acc.astype(compute_dtype)
        # nn.Dropout is identity at inference time -> nothing to emit.

    if with_features:
        feat_ref[...] = feats_f32.astype(feat_ref.dtype)

    y = jnp.dot(h, w_refs[num_hidden][...], preferred_element_type=jnp.float32)
    y = y + b_refs[num_hidden][...]
    out_ref[...] = y.astype(out_ref.dtype)


def fused_mlp_call(x_pad, packed_ws, packed_bs, tm, *, with_features,
                   vmem_limit_bytes):
    """Single pallas_call over the whole network.  x_pad: (Bp, K_pad) bf16."""
    Bp, K_pad = x_pad.shape
    num_hidden = len(packed_ws) - 1
    grid_steps = Bp // tm
    grid = (grid_steps,)

    in_specs = [_x_block_spec(tm, K_pad, grid_steps)]
    for w in packed_ws:
        kin, kout = w.shape
        # weights/biases: full-array blocks, resident in VMEM across M tiles
        in_specs.append(pl.BlockSpec((kin, kout), lambda i: (0, 0)))
        in_specs.append(pl.BlockSpec((1, kout), lambda i: (0, 0)))

    n_out_pad = packed_ws[-1].shape[1]
    n_feat_pad = packed_ws[-1].shape[0]

    out_shape = [jax.ShapeDtypeStruct((Bp, n_out_pad), jnp.float32)]
    out_specs = [pl.BlockSpec((tm, n_out_pad), lambda i: (i, 0))]
    if with_features:
        out_shape.append(jax.ShapeDtypeStruct((Bp, n_feat_pad), jnp.float32))
        out_specs.append(pl.BlockSpec((tm, n_feat_pad), lambda i: (i, 0)))

    flat_inputs = [x_pad]
    for w, b in zip(packed_ws, packed_bs):
        flat_inputs.append(w)
        flat_inputs.append(b)

    return pl.pallas_call(
        functools.partial(_fused_mlp_kernel, num_hidden=num_hidden,
                          with_features=with_features),
        out_shape=tuple(out_shape),
        grid=grid,
        in_specs=in_specs,
        out_specs=tuple(out_specs),
        compiler_params=pltpu.CompilerParams(
            dimension_semantics=("parallel",),
            vmem_limit_bytes=vmem_limit_bytes),
    )(*flat_inputs)


# ---------------------------------------------------------------------------
# M-tile selection + VMEM budget (keeps within v7x's 64 MiB physical VMEM).
# ---------------------------------------------------------------------------
def _select_tile_and_vmem(B, packed_ws, packed_bs, with_features):
    K_pad = packed_ws[0].shape[0]
    out_pad = packed_ws[-1].shape[1]
    feat_pad = packed_ws[-1].shape[0]

    # Resident weights/biases (conservatively count double buffering).
    w_bytes = sum(int(w.size) * w.dtype.itemsize for w in packed_ws) * 2
    w_bytes += sum(int(b.size) * b.dtype.itemsize for b in packed_bs) * 2

    bp8 = _round_up(max(int(B), 1), 8)
    # >= 2 grid steps whenever the batch spans >= 16 rows (feeds both v7x
    # TensorCores, enables pipelining); tile capped at 256 rows.
    tm = min(256, max(8, _round_up((bp8 + 1) // 2, 8)))

    def tile_bytes(t):
        xb = t * K_pad * 2 * 3                    # bf16 x tile, up to 3 buffers
        ob = t * out_pad * 4 * 2                  # f32 logits tile, 2 buffers
        fb = t * feat_pad * 4 * 2 if with_features else 0
        return xb + ob + fb

    budget = 24 * 1024 * 1024                     # stay well under v7x limits
    while tm > 8 and w_bytes + tile_bytes(tm) > budget:
        tm = max(8, _round_up(tm // 2, 8))

    needed = w_bytes + tile_bytes(tm)
    vmem_limit = min(64 * 1024 * 1024, max(2 * needed, 32 * 1024 * 1024))
    return tm, vmem_limit


# ---------------------------------------------------------------------------
# Parameter init (PyTorch Linear default init, weight shape (out, in))
# ---------------------------------------------------------------------------
def init_linear_params(key, in_features, out_features, dtype=jnp.float32):
    kw, kb = jax.random.split(key)
    bound = 1.0 / (in_features ** 0.5)
    w = jax.random.uniform(kw, (out_features, in_features), dtype,
                           minval=-bound, maxval=bound)
    b = jax.random.uniform(kb, (out_features,), dtype,
                           minval=-bound, maxval=bound)
    return w, b


def init_mlp_params(key, model_configs):
    input_size = (model_configs["input_height"]
                  * model_configs["input_width"]
                  * model_configs["input_channels"])
    layers = model_configs["hidden_layers"]
    output_size = model_configs["output_size"]

    sizes = [input_size] + list(layers)
    params = {"hidden": [], "output": None}
    keys = jax.random.split(key, len(layers) + 1)
    for i in range(len(layers)):
        params["hidden"].append(init_linear_params(keys[i], sizes[i], sizes[i + 1]))
    params["output"] = init_linear_params(keys[-1], layers[-1], output_size)
    return params


# ---------------------------------------------------------------------------
# One-time packing: pre-transpose to (in, out), cast weights to bf16, and
# zero-pad to lane-dense widths (multiples of 128).  Biases stay f32.
# ---------------------------------------------------------------------------
def pack_mlp_params(params, model_configs, w_dtype=jnp.bfloat16):
    input_size = (model_configs["input_height"]
                  * model_configs["input_width"]
                  * model_configs["input_channels"])
    layer_ws = [w for (w, _) in params["hidden"]] + [params["output"][0]]
    layer_bs = [b for (_, b) in params["hidden"]] + [params["output"][1]]

    packed_ws, packed_bs = [], []
    in_pad = _round_up(input_size, 128)
    for w, b in zip(layer_ws, layer_bs):
        out_f, in_f = w.shape
        out_pad = _round_up(out_f, 128)
        wt = jnp.zeros((in_pad, out_pad), w_dtype)
        wt = wt.at[:in_f, :out_f].set(w.T.astype(w_dtype))   # transpose once
        bb = jnp.zeros((1, out_pad), jnp.float32)
        bb = bb.at[0, :out_f].set(b.astype(jnp.float32))
        packed_ws.append(wt)
        packed_bs.append(bb)
        in_pad = out_pad

    return {
        "ws": packed_ws,
        "bs": packed_bs,
        "input_size": input_size,
        "feat_size": model_configs["hidden_layers"][-1],
        "output_size": model_configs["output_size"],
    }


# ---------------------------------------------------------------------------
# Forward pass (mirrors MLP.forward; eval mode -> dropout is identity)
# ---------------------------------------------------------------------------
def mlp_forward(packed, x_nchw, return_features=False):
    ws, bs = packed["ws"], packed["bs"]
    B = x_nchw.shape[0]
    x = x_nchw.reshape(B, -1)                 # nn.Flatten on NCHW
    K = x.shape[1]
    K_pad = ws[0].shape[0]

    tm, vmem_limit = _select_tile_and_vmem(B, ws, bs, return_features)
    Bp = _round_up(B, tm)
    x_pad = jnp.zeros((Bp, K_pad), ws[0].dtype).at[:B, :K].set(
        x.astype(ws[0].dtype))
    # TODO(synk): for tiny latency-bound batches the pad/slice could be folded
    # into the kernel (masked rows) to shave a couple of XLA dispatches.

    outs = fused_mlp_call(x_pad, ws, bs, tm, with_features=return_features,
                          vmem_limit_bytes=vmem_limit)
    logits = outs[0][:B, :packed["output_size"]]
    if return_features:
        feats = outs[1][:B, :packed["feat_size"]]
        return logits, feats
    return logits


def predict_class_probs(packed, x_nchw):
    logits = mlp_forward(packed, x_nchw)
    return jax.nn.softmax(logits, axis=1)


# ---------------------------------------------------------------------------
# Main
# ---------------------------------------------------------------------------
if __name__ == "__main__":
    model_configs = {
        "input_height": 16,
        "input_width": 16,
        "input_channels": 4,
        "output_size": 10,
        "hidden_layers": [64, 32],
        "dropout_probabilities": [0.0, 0.0],
    }

    root_key = jax.random.PRNGKey(0)
    pkey, xkey = jax.random.split(root_key)

    params = init_mlp_params(pkey, model_configs)
    packed = pack_mlp_params(params, model_configs)   # transpose + pad + bf16 once

    # Small deterministic input, NCHW like PyTorch.
    x = jax.random.normal(
        xkey,
        (2,
         model_configs["input_channels"],
         model_configs["input_height"],
         model_configs["input_width"]),
        dtype=jnp.float32,
    )

    out, feats = mlp_forward(packed, x, return_features=True)
    out_only = mlp_forward(packed, x, return_features=False)
    probs = predict_class_probs(packed, x)
    jax.block_until_ready((out, feats, out_only, probs))

    # sanity checks against a pure-JAX f32 reference (unpadded, un-fused)
    xf = x.reshape(2, -1)
    ref = xf
    for (w, b) in params["hidden"]:
        ref = jnp.maximum(ref @ w.T + b, 0.0)
    ref_out = ref @ params["output"][0].T + params["output"][1]

    assert out.shape == (2, model_configs["output_size"])
    assert feats.shape == (2, model_configs["hidden_layers"][-1])
    assert out_only.shape == (2, model_configs["output_size"])
    # bf16 weights/activations -> loosened tolerance vs. the f32 reference.
    assert jnp.allclose(out, ref_out, atol=2e-2, rtol=2e-2)
    assert jnp.allclose(out_only, out, atol=1e-6, rtol=1e-6)
    assert jnp.allclose(feats, ref, atol=2e-2, rtol=2e-2)
    assert jnp.allclose(jnp.sum(probs, axis=1), 1.0, atol=1e-5)

    print("KERNEL_OK")
</pallas_src>

<mosaic_0001>
module attributes {stable_mosaic.version = 11 : i64} {
  func.func @_fused_mlp_kernel(%arg0: i32, %arg1: memref<8x1024xbf16, #tpu.memory_space<vmem>>, %arg2: memref<1024x128xbf16, #tpu.memory_space<vmem>>, %arg3: memref<1x128xf32, #tpu.memory_space<vmem>>, %arg4: memref<128x128xbf16, #tpu.memory_space<vmem>>, %arg5: memref<1x128xf32, #tpu.memory_space<vmem>>, %arg6: memref<128x128xbf16, #tpu.memory_space<vmem>>, %arg7: memref<1x128xf32, #tpu.memory_space<vmem>>, %arg8: memref<8x128xf32, #tpu.memory_space<vmem>>, %arg9: memref<8x128xf32, #tpu.memory_space<vmem>>) attributes {dimension_semantics = [#tpu.dimension_semantics<parallel>], iteration_bounds = array<i64: 1>, scalar_prefetch = 0 : i64, scratch_operands = 0 : i64, tpu.core_type = #tpu.core_type<tc>, window_params = [{transform_indices = @transform_0, window_bounds = array<i64: 8, 1024>}, {pipeline_mode = #tpu.pipeline_mode<synchronous>, transform_indices = @transform_1, window_bounds = array<i64: 1024, 128>}, {pipeline_mode = #tpu.pipeline_mode<synchronous>, transform_indices = @transform_2, window_bounds = array<i64: 1, 128>}, {pipeline_mode = #tpu.pipeline_mode<synchronous>, transform_indices = @transform_3, window_bounds = array<i64: 128, 128>}, {pipeline_mode = #tpu.pipeline_mode<synchronous>, transform_indices = @transform_4, window_bounds = array<i64: 1, 128>}, {pipeline_mode = #tpu.pipeline_mode<synchronous>, transform_indices = @transform_5, window_bounds = array<i64: 128, 128>}, {pipeline_mode = #tpu.pipeline_mode<synchronous>, transform_indices = @transform_6, window_bounds = array<i64: 1, 128>}, {transform_indices = @transform_7, window_bounds = array<i64: 8, 128>}, {transform_indices = @transform_8, window_bounds = array<i64: 8, 128>}]} {
    %c0 = arith.constant 0 : index
    %c0_0 = arith.constant 0 : index
    %0 = vector.load %arg1[%c0, %c0_0] : memref<8x1024xbf16, #tpu.memory_space<vmem>>, vector<8x1024xbf16>
    %c0_1 = arith.constant 0 : index
    %c0_2 = arith.constant 0 : index
    %1 = vector.load %arg2[%c0_1, %c0_2] : memref<1024x128xbf16, #tpu.memory_space<vmem>>, vector<1024x128xbf16>
    %cst = arith.constant dense<0.000000e+00> : vector<8x128xf32>
    %2 = tpu.matmul %0, %1, %cst {dimension_numbers = #tpu.dot_dimension_numbers<[1], [0], [0], [1], [0, 0, 1, 1], [], []>} : vector<8x1024xbf16>, vector<1024x128xbf16>, vector<8x128xf32> -> vector<8x128xf32>
    %c0_3 = arith.constant 0 : index
    %c0_4 = arith.constant 0 : index
    %3 = vector.load %arg3[%c0_3, %c0_4] : memref<1x128xf32, #tpu.memory_space<vmem>>, vector<1x128xf32>
    %4 = vector.broadcast %3 : vector<1x128xf32> to vector<8x128xf32>
    %5 = arith.addf %2, %4 : vector<8x128xf32>
    %cst_5 = arith.constant 0.000000e+00 : f32
    %6 = vector.broadcast %cst_5 : f32 to vector<8x128xf32>
    %7 = arith.maximumf %5, %6 : vector<8x128xf32>
    %8 = arith.truncf %7 : vector<8x128xf32> to vector<8x128xbf16>
    %c0_6 = arith.constant 0 : index
    %c0_7 = arith.constant 0 : index
    %9 = vector.load %arg4[%c0_6, %c0_7] : memref<128x128xbf16, #tpu.memory_space<vmem>>, vector<128x128xbf16>
    %cst_8 = arith.constant dense<0.000000e+00> : vector<8x128xf32>
    %10 = tpu.matmul %8, %9, %cst_8 {dimension_numbers = #tpu.dot_dimension_numbers<[1], [0], [0], [1], [0, 0, 1, 1], [], []>} : vector<8x128xbf16>, vector<128x128xbf16>, vector<8x128xf32> -> vector<8x128xf32>
    %c0_9 = arith.constant 0 : index
    %c0_10 = arith.constant 0 : index
    %11 = vector.load %arg5[%c0_9, %c0_10] : memref<1x128xf32, #tpu.memory_space<vmem>>, vector<1x128xf32>
    %12 = vector.broadcast %11 : vector<1x128xf32> to vector<8x128xf32>
    %13 = arith.addf %10, %12 : vector<8x128xf32>
    %cst_11 = arith.constant 0.000000e+00 : f32
    %14 = vector.broadcast %cst_11 : f32 to vector<8x128xf32>
    %15 = arith.maximumf %13, %14 : vector<8x128xf32>
    %16 = arith.truncf %15 : vector<8x128xf32> to vector<8x128xbf16>
    %c0_12 = arith.constant 0 : index
    %c0_13 = arith.constant 0 : index
    %17 = vector.load %arg9[%c0_12, %c0_13] : memref<8x128xf32, #tpu.memory_space<vmem>>, vector<8x128xf32>
    tpu.vector_store %arg9[%c0_12, %c0_13], %15 {strides = array<i32>} : memref<8x128xf32, #tpu.memory_space<vmem>>, vector<8x128xf32>,
    %c0_14 = arith.constant 0 : index
    %c0_15 = arith.constant 0 : index
    %18 = vector.load %arg6[%c0_14, %c0_15] : memref<128x128xbf16, #tpu.memory_space<vmem>>, vector<128x128xbf16>
    %cst_16 = arith.constant dense<0.000000e+00> : vector<8x128xf32>
    %19 = tpu.matmul %16, %18, %cst_16 {dimension_numbers = #tpu.dot_dimension_numbers<[1], [0], [0], [1], [0, 0, 1, 1], [], []>} : vector<8x128xbf16>, vector<128x128xbf16>, vector<8x128xf32> -> vector<8x128xf32>
    %c0_17 = arith.constant 0 : index
    %c0_18 = arith.constant 0 : index
    %20 = vector.load %arg7[%c0_17, %c0_18] : memref<1x128xf32, #tpu.memory_space<vmem>>, vector<1x128xf32>
    %21 = vector.broadcast %20 : vector<1x128xf32> to vector<8x128xf32>
    %22 = arith.addf %19, %21 : vector<8x128xf32>
    %c0_19 = arith.constant 0 : index
    %c0_20 = arith.constant 0 : index
    %23 = vector.load %arg8[%c0_19, %c0_20] : memref<8x128xf32, #tpu.memory_space<vmem>>, vector<8x128xf32>
    tpu.vector_store %arg8[%c0_19, %c0_20], %22 {strides = array<i32>} : memref<8x128xf32, #tpu.memory_space<vmem>>, vector<8x128xf32>,
    return
  }
  func.func @transform_0(%arg0: i32) -> (i32, i32) {
    %c0_i32 = arith.constant 0 : i32
    %c0_i32_0 = arith.constant 0 : i32
    return %arg0, %c0_i32 : i32, i32
  }
  func.func @transform_1(%arg0: i32) -> (i32, i32) {
    %c0_i32 = arith.constant 0 : i32
    %c0_i32_0 = arith.constant 0 : i32
    %c0_i32_1 = arith.constant 0 : i32
    return %c0_i32, %c0_i32_0 : i32, i32
  }
  func.func @transform_2(%arg0: i32) -> (i32, i32) {
    %c0_i32 = arith.constant 0 : i32
    %c0_i32_0 = arith.constant 0 : i32
    %c0_i32_1 = arith.constant 0 : i32
    return %c0_i32, %c0_i32_0 : i32, i32
  }
  func.func @transform_3(%arg0: i32) -> (i32, i32) {
    %c0_i32 = arith.constant 0 : i32
    %c0_i32_0 = arith.constant 0 : i32
    %c0_i32_1 = arith.constant 0 : i32
    return %c0_i32, %c0_i32_0 : i32, i32
  }
  func.func @transform_4(%arg0: i32) -> (i32, i32) {
    %c0_i32 = arith.constant 0 : i32
    %c0_i32_0 = arith.constant 0 : i32
    %c0_i32_1 = arith.constant 0 : i32
    return %c0_i32, %c0_i32_0 : i32, i32
  }
  func.func @transform_5(%arg0: i32) -> (i32, i32) {
    %c0_i32 = arith.constant 0 : i32
    %c0_i32_0 = arith.constant 0 : i32
    %c0_i32_1 = arith.constant 0 : i32
    return %c0_i32, %c0_i32_0 : i32, i32
  }
  func.func @transform_6(%arg0: i32) -> (i32, i32) {
    %c0_i32 = arith.constant 0 : i32
    %c0_i32_0 = arith.constant 0 : i32
    %c0_i32_1 = arith.constant 0 : i32
    return %c0_i32, %c0_i32_0 : i32, i32
  }
  func.func @transform_7(%arg0: i32) -> (i32, i32) {
    %c0_i32 = arith.constant 0 : i32
    %c0_i32_0 = arith.constant 0 : i32
    return %arg0, %c0_i32 : i32, i32
  }
  func.func @transform_8(%arg0: i32) -> (i32, i32) {
    %c0_i32 = arith.constant 0 : i32
    %c0_i32_0 = arith.constant 0 : i32
    return %arg0, %c0_i32 : i32, i32
  }
}

</mosaic_0001>

<llo_original>
// kernel: tpu_custom_call.1
$region0: #{tpu_custom_call.1}
  #allocation0 [shape = 'u32[]', space=smem, size = 0x4, offset = 0x4, fixed_abs, tag = 'smem constant byte address 0x4 - core index']
  #allocation1 [shape = 'u32[144,128]{1,0:T(1,128)}', space=vmem, size = 0x12000, scoped, tag = 'internal scratch']
  %s0 = inlined_call_operand.hbm [shape: bf16[8,1024], index: 0, kind: input, shape index: {}]
  %s1 = inlined_call_operand.hbm [shape: bf16[1024,128], index: 1, kind: input, shape index: {}]
  %s2 = inlined_call_operand.vmem [shape: f32[1,128], index: 2, kind: input, shape index: {}]
  %s3 = inlined_call_operand.hbm [shape: bf16[128,128], index: 3, kind: input, shape index: {}]
  %s4 = inlined_call_operand.vmem [shape: f32[1,128], index: 4, kind: input, shape index: {}]
  %s5 = inlined_call_operand.hbm [shape: bf16[128,128], index: 5, kind: input, shape index: {}]
  %s6 = inlined_call_operand.vmem [shape: f32[1,128], index: 6, kind: input, shape index: {}]
  %s7 = inlined_call_operand.hbm [shape: f32[8,128], index: 7, kind: output, shape index: {0}]
  %s8 = inlined_call_operand.hbm [shape: f32[8,128], index: 8, kind: output, shape index: {1}]
  %9 = xla_tuple %s7, %s8
  %s10 = sld [smem:[#allocation0]]
  $region62: #{tpu_custom_call.1} parent=0
    _
  %s12 = ssub.s32 1, %s10
  %s13 = scalar_select 0, %s12, %s10
  $region1: #{tpu_custom_call.1} parent=0
    #allocation2 [shape = 'u8[16384]{0}', space=vmem, size = 0x4000, scoped, tag = 'input window, operand 0, single buffered']
    #allocation3 [shape = 's32[1]{0}', space=sflag, size = 0x4, scoped, tag = 'scoped memory for tpu_custom_call.1']
    #allocation4 [shape = 's32[1]{0}', space=sflag, size = 0x4, scoped, tag = 'scoped memory for tpu_custom_call.1']
    #allocation5 [shape = 'u8[262144]{0}', space=vmem, size = 0x40000, scoped, tag = 'input window, operand 1, single buffered']
    #allocation6 [shape = 's32[1]{0}', space=sflag, size = 0x4, scoped, tag = 'scoped memory for tpu_custom_call.1']
    #allocation7 [shape = 'u8[32768]{0}', space=vmem, size = 0x8000, scoped, tag = 'input window, operand 3, single buffered']
    #allocation8 [shape = 'u8[32768]{0}', space=vmem, size = 0x8000, scoped, tag = 'input window, operand 5, single buffered']
    #allocation9 [shape = 's32[1]{0}', space=sflag, size = 0x4, scoped, tag = 'scoped memory for tpu_custom_call.1']
    #allocation10 [shape = 'u8[4096]{0}', space=vmem, size = 0x1000, scoped, tag = 'output window, operand 0, single buffered']
    #allocation11 [shape = 'u8[4096]{0}', space=vmem, size = 0x1000, scoped, tag = 'output window, operand 1, single buffered']
    #allocation12 [shape = 's32[1]{0}', space=sflag, size = 0x4, scoped, tag = 'scoped memory for tpu_custom_call.1']
    %14 = vsyncpa [#allocation3], 0
    %15 = vsyncpa [#allocation6], 0
    %16 = vsyncpa [#allocation9], 0
    %17 = vsyncpa [#allocation4], 0
    %18 = vsyncpa [#allocation12], 0
    // Predicated region
    $region2: #{tpu_custom_call.1} parent=1 // pred_check
      _
    $region3: #{tpu_custom_call.1} parent=1 // pred_check_branch
      %20 = sbr.rel (0) target = $region5
    $region4: #{tpu_custom_call.1} parent=1 // pred_region
      %s22 = ssub.s32 512, 512
      %23 = vsyncadd [#allocation3], %s22
      %s25 = sshll.u32 [#allocation2], 4
      %s26 = int_to_ptr.vmem [resolvable:$true] %s25
      %28 = dma.hbm_to_vmem [thread:$0]  %s0, 512, %s26, [#allocation3]
    $region5: #{tpu_custom_call.1} parent=1 // pred_fallthru
      _
    // Predicated region
    $region6: #{tpu_custom_call.1} parent=1 // pred_check
      _
    $region7: #{tpu_custom_call.1} parent=1 // pred_check_branch
      %30 = sbr.rel (0) target = $region9
    $region8: #{tpu_custom_call.1} parent=1 // pred_region
      %s32 = ssub.s32 8192, 8192
      %33 = vsyncadd [#allocation6], %s32
      %s34 = sshll.u32 [#allocation5], 4
      %s35 = int_to_ptr.vmem [resolvable:$true] %s34
      %40 = dma.hbm_to_vmem [thread:$0]  %s1, 8192, %s35, [#allocation6], 64, 64, 4
    $region9: #{tpu_custom_call.1} parent=1 // pred_fallthru
      _
    // Predicated region
    $region10: #{tpu_custom_call.1} parent=1 // pred_check
      _
    $region11: #{tpu_custom_call.1} parent=1 // pred_check_branch
      %42 = sbr.rel (0) target = $region13
    $region12: #{tpu_custom_call.1} parent=1 // pred_region
      _
    $region13: #{tpu_custom_call.1} parent=1 // pred_fallthru
      _
    // Predicated region
    $region14: #{tpu_custom_call.1} parent=1 // pred_check
      _
    $region15: #{tpu_custom_call.1} parent=1 // pred_check_branch
      %44 = sbr.rel (0) target = $region17
    $region16: #{tpu_custom_call.1} parent=1 // pred_region
      %s46 = ssub.s32 1024, 1024
      %47 = vsyncadd [#allocation6], %s46
      %s48 = sshll.u32 [#allocation7], 4
      %s49 = int_to_ptr.vmem [resolvable:$true] %s48
      %54 = dma.hbm_to_vmem [thread:$0]  %s3, 1024, %s49, [#allocation6], 64, 64, 4
    $region17: #{tpu_custom_call.1} parent=1 // pred_fallthru
      _
    // Predicated region
    $region18: #{tpu_custom_call.1} parent=1 // pred_check
      _
    $region19: #{tpu_custom_call.1} parent=1 // pred_check_branch
      %56 = sbr.rel (0) target = $region21
    $region20: #{tpu_custom_call.1} parent=1 // pred_region
      _
    $region21: #{tpu_custom_call.1} parent=1 // pred_fallthru
      _
    // Predicated region
    $region22: #{tpu_custom_call.1} parent=1 // pred_check
      _
    $region23: #{tpu_custom_call.1} parent=1 // pred_check_branch
      %58 = sbr.rel (0) target = $region25
    $region24: #{tpu_custom_call.1} parent=1 // pred_region
      %s60 = ssub.s32 1024, 1024
      %61 = vsyncadd [#allocation9], %s60
      %s62 = sshll.u32 [#allocation8], 4
      %s63 = int_to_ptr.vmem [resolvable:$true] %s62
      %68 = dma.hbm_to_vmem [thread:$0]  %s5, 1024, %s63, [#allocation9], 64, 64, 4
    $region25: #{tpu_custom_call.1} parent=1 // pred_fallthru
      _
    // Predicated region
    $region26: #{tpu_custom_call.1} parent=1 // pred_check
      _
    $region27: #{tpu_custom_call.1} parent=1 // pred_check_branch
      %70 = sbr.rel (0) target = $region29
    $region28: #{tpu_custom_call.1} parent=1 // pred_region
      _
    $region29: #{tpu_custom_call.1} parent=1 // pred_fallthru
      _
    // Predicated region
    $region30: #{tpu_custom_call.1} parent=1 // pred_check
      _
    $region31: #{tpu_custom_call.1} parent=1 // pred_check_branch
      %72 = sbr.rel (0) target = $region33
    $region32: #{tpu_custom_call.1} parent=1 // pred_region
      %73 = dma.done [#allocation3], 512
    $region33: #{tpu_custom_call.1} parent=1 // pred_fallthru
      _
    // Predicated region
    $region34: #{tpu_custom_call.1} parent=1 // pred_check
      _
    $region35: #{tpu_custom_call.1} parent=1 // pred_check_branch
      %75 = sbr.rel (0) target = $region37
    $region36: #{tpu_custom_call.1} parent=1 // pred_region
      %76 = dma.done [#allocation6], 8192
    $region37: #{tpu_custom_call.1} parent=1 // pred_fallthru
      _
    // Predicated region
    $region38: #{tpu_custom_call.1} parent=1 // pred_check
      _
    $region39: #{tpu_custom_call.1} parent=1 // pred_check_branch
      %78 = sbr.rel (0) target = $region41
    $region40: #{tpu_custom_call.1} parent=1 // pred_region
      %79 = dma.done [#allocation6], 1024
    $region41: #{tpu_custom_call.1} parent=1 // pred_fallthru
      _
    // Predicated region
    $region42: #{tpu_custom_call.1} parent=1 // pred_check
      _
    $region43: #{tpu_custom_call.1} parent=1 // pred_check_branch
      %81 = sbr.rel (0) target = $region45
    $region44: #{tpu_custom_call.1} parent=1 // pred_region
      %82 = dma.done [#allocation9], 1024
    $region45: #{tpu_custom_call.1} parent=1 // pred_fallthru
      _
    %v84 = vld [vmem:[#allocation2] sm:$0xff]
    %v85 = vld [vmem:[#allocation2 + $0x8] sm:$0xff]
    %v86 = vld [vmem:[#allocation2 + $0x10] sm:$0xff]
    %v87 = vld [vmem:[#allocation2 + $0x18] sm:$0xff]
    %v88 = vld [vmem:[#allocation5] sm:$0xf]
    %v89 = vld [vmem:[#allocation5 + $0x4] sm:$0xf]
    %v90 = vld [vmem:[#allocation5 + $0x8] sm:$0xf]
    %v91 = vld [vmem:[#allocation5 + $0xc] sm:$0xf]
    %v92 = vld [vmem:[#allocation5 + $0x10] sm:$0xf]
    %v93 = vld [vmem:[#allocation5 + $0x14] sm:$0xf]
    %v94 = vld [vmem:[#allocation5 + $0x18] sm:$0xf]
    %v95 = vld [vmem:[#allocation5 + $0x1c] sm:$0xf]
    %v96 = vld [vmem:[#allocation5 + $0x20] sm:$0xf]
    %v97 = vld [vmem:[#allocation5 + $0x24] sm:$0xf]
    %v98 = vld [vmem:[#allocation5 + $0x28] sm:$0xf]
    %v99 = vld [vmem:[#allocation5 + $0x2c] sm:$0xf]
    %v100 = vld [vmem:[#allocation5 + $0x30] sm:$0xf]
    %v101 = vld [vmem:[#allocation5 + $0x34] sm:$0xf]
    %v102 = vld [vmem:[#allocation5 + $0x38] sm:$0xf]
    %v103 = vld [vmem:[#allocation5 + $0x3c] sm:$0xf]
    %v104 = vld [vmem:[#allocation5 + $0x40] sm:$0xf]
    %v105 = vld [vmem:[#allocation5 + $0x44] sm:$0xf]
    %v106 = vld [vmem:[#allocation5 + $0x48] sm:$0xf]
    %v107 = vld [vmem:[#allocation5 + $0x4c] sm:$0xf]
    %v108 = vld [vmem:[#allocation5 + $0x50] sm:$0xf]
    %v109 = vld [vmem:[#allocation5 + $0x54] sm:$0xf]
    %v110 = vld [vmem:[#allocation5 + $0x58] sm:$0xf]
    %v111 = vld [vmem:[#allocation5 + $0x5c] sm:$0xf]
    %v112 = vld [vmem:[#allocation5 + $0x60] sm:$0xf]
    %v113 = vld [vmem:[#allocation5 + $0x64] sm:$0xf]
    %v114 = vld [vmem:[#allocation5 + $0x68] sm:$0xf]
    %v115 = vld [vmem:[#allocation5 + $0x6c] sm:$0xf]
    %v116 = vld [vmem:[#allocation5 + $0x70] sm:$0xf]
    %v117 = vld [vmem:[#allocation5 + $0x74] sm:$0xf]
    %v118 = vld [vmem:[#allocation5 + $0x78] sm:$0xf]
    %v119 = vld [vmem:[#allocation5 + $0x7c] sm:$0xf]
    %v120 = vld [vmem:[#allocation5 + $0x80] sm:$0xf]
    %v121 = vld [vmem:[#allocation5 + $0x84] sm:$0xf]
    %v122 = vld [vmem:[#allocation5 + $0x88] sm:$0xf]
    %v123 = vld [vmem:[#allocation5 + $0x8c] sm:$0xf]
    %v124 = vld [vmem:[#allocation5 + $0x90] sm:$0xf]
    %v125 = vld [vmem:[#allocation5 + $0x94] sm:$0xf]
    %v126 = vld [vmem:[#allocation5 + $0x98] sm:$0xf]
    %v127 = vld [vmem:[#allocation5 + $0x9c] sm:$0xf]
    %v128 = vld [vmem:[#allocation5 + $0xa0] sm:$0xf]
    %v129 = vld [vmem:[#allocation5 + $0xa4] sm:$0xf]
    %v130 = vld [vmem:[#allocation5 + $0xa8] sm:$0xf]
    %v131 = vld [vmem:[#allocation5 + $0xac] sm:$0xf]
    %v132 = vld [vmem:[#allocation5 + $0xb0] sm:$0xf]
    %v133 = vld [vmem:[#allocation5 + $0xb4] sm:$0xf]
    %v134 = vld [vmem:[#allocation5 + $0xb8] sm:$0xf]
    %v135 = vld [vmem:[#allocation5 + $0xbc] sm:$0xf]
    %v136 = vld [vmem:[#allocation5 + $0xc0] sm:$0xf]
    %v137 = vld [vmem:[#allocation5 + $0xc4] sm:$0xf]
    %v138 = vld [vmem:[#allocation5 + $0xc8] sm:$0xf]
    %v139 = vld [vmem:[#allocation5 + $0xcc] sm:$0xf]
    %v140 = vld [vmem:[#allocation5 + $0xd0] sm:$0xf]
    %v141 = vld [vmem:[#allocation5 + $0xd4] sm:$0xf]
    %v142 = vld [vmem:[#allocation5 + $0xd8] sm:$0xf]
    %v143 = vld [vmem:[#allocation5 + $0xdc] sm:$0xf]
    %v144 = vld [vmem:[#allocation5 + $0xe0] sm:$0xf]
    %v145 = vld [vmem:[#allocation5 + $0xe4] sm:$0xf]
    %v146 = vld [vmem:[#allocation5 + $0xe8] sm:$0xf]
    %v147 = vld [vmem:[#allocation5 + $0xec] sm:$0xf]
    %v148 = vld [vmem:[#allocation5 + $0xf0] sm:$0xf]
    %v149 = vld [vmem:[#allocation5 + $0xf4] sm:$0xf]
    %v150 = vld [vmem:[#allocation5 + $0xf8] sm:$0xf]
    %v151 = vld [vmem:[#allocation5 + $0xfc] sm:$0xf]
    %v152 = vld [vmem:[#allocation5 + $0x100] sm:$0xf]
    %v153 = vld [vmem:[#allocation5 + $0x104] sm:$0xf]
    %v154 = vld [vmem:[#allocation5 + $0x108] sm:$0xf]
    %v155 = vld [vmem:[#allocation5 + $0x10c] sm:$0xf]
    %v156 = vld [vmem:[#allocation5 + $0x110] sm:$0xf]
    %v157 = vld [vmem:[#allocation5 + $0x114] sm:$0xf]
    %v158 = vld [vmem:[#allocation5 + $0x118] sm:$0xf]
    %v159 = vld [vmem:[#allocation5 + $0x11c] sm:$0xf]
    %v160 = vld [vmem:[#allocation5 + $0x120] sm:$0xf]
    %v161 = vld [vmem:[#allocation5 + $0x124] sm:$0xf]
    %v162 = vld [vmem:[#allocation5 + $0x128] sm:$0xf]
    %v163 = vld [vmem:[#allocation5 + $0x12c] sm:$0xf]
    %v164 = vld [vmem:[#allocation5 + $0x130] sm:$0xf]
    %v165 = vld [vmem:[#allocation5 + $0x134] sm:$0xf]
    %v166 = vld [vmem:[#allocation5 + $0x138] sm:$0xf]
    %v167 = vld [vmem:[#allocation5 + $0x13c] sm:$0xf]
    %v168 = vld [vmem:[#allocation5 + $0x140] sm:$0xf]
    %v169 = vld [vmem:[#allocation5 + $0x144] sm:$0xf]
    %v170 = vld [vmem:[#allocation5 + $0x148] sm:$0xf]
    %v171 = vld [vmem:[#allocation5 + $0x14c] sm:$0xf]
    %v172 = vld [vmem:[#allocation5 + $0x150] sm:$0xf]
    %v173 = vld [vmem:[#allocation5 + $0x154] sm:$0xf]
    %v174 = vld [vmem:[#allocation5 + $0x158] sm:$0xf]
    %v175 = vld [vmem:[#allocation5 + $0x15c] sm:$0xf]
    %v176 = vld [vmem:[#allocation5 + $0x160] sm:$0xf]
    %v177 = vld [vmem:[#allocation5 + $0x164] sm:$0xf]
    %v178 = vld [vmem:[#allocation5 + $0x168] sm:$0xf]
    %v179 = vld [vmem:[#allocation5 + $0x16c] sm:$0xf]
    %v180 = vld [vmem:[#allocation5 + $0x170] sm:$0xf]
    %v181 = vld [vmem:[#allocation5 + $0x174] sm:$0xf]
    %v182 = vld [vmem:[#allocation5 + $0x178] sm:$0xf]
    %v183 = vld [vmem:[#allocation5 + $0x17c] sm:$0xf]
    %v184 = vld [vmem:[#allocation5 + $0x180] sm:$0xf]
    %v185 = vld [vmem:[#allocation5 + $0x184] sm:$0xf]
    %v186 = vld [vmem:[#allocation5 + $0x188] sm:$0xf]
    %v187 = vld [vmem:[#allocation5 + $0x18c] sm:$0xf]
    %v188 = vld [vmem:[#allocation5 + $0x190] sm:$0xf]
    %v189 = vld [vmem:[#allocation5 + $0x194] sm:$0xf]
    %v190 = vld [vmem:[#allocation5 + $0x198] sm:$0xf]
    %v191 = vld [vmem:[#allocation5 + $0x19c] sm:$0xf]
    %v192 = vld [vmem:[#allocation5 + $0x1a0] sm:$0xf]
    %v193 = vld [vmem:[#allocation5 + $0x1a4] sm:$0xf]
    %v194 = vld [vmem:[#allocation5 + $0x1a8] sm:$0xf]
    %v195 = vld [vmem:[#allocation5 + $0x1ac] sm:$0xf]
    %v196 = vld [vmem:[#allocation5 + $0x1b0] sm:$0xf]
    %v197 = vld [vmem:[#allocation5 + $0x1b4] sm:$0xf]
    %v198 = vld [vmem:[#allocation5 + $0x1b8] sm:$0xf]
    %v199 = vld [vmem:[#allocation5 + $0x1bc] sm:$0xf]
    %v200 = vld [vmem:[#allocation5 + $0x1c0] sm:$0xf]
    %v201 = vld [vmem:[#allocation5 + $0x1c4] sm:$0xf]
    %v202 = vld [vmem:[#allocation5 + $0x1c8] sm:$0xf]
    %v203 = vld [vmem:[#allocation5 + $0x1cc] sm:$0xf]
    %v204 = vld [vmem:[#allocation5 + $0x1d0] sm:$0xf]
    %v205 = vld [vmem:[#allocation5 + $0x1d4] sm:$0xf]
    %v206 = vld [vmem:[#allocation5 + $0x1d8] sm:$0xf]
    %v207 = vld [vmem:[#allocation5 + $0x1dc] sm:$0xf]
    %v208 = vld [vmem:[#allocation5 + $0x1e0] sm:$0xf]
    %v209 = vld [vmem:[#allocation5 + $0x1e4] sm:$0xf]
    %v210 = vld [vmem:[#allocation5 + $0x1e8] sm:$0xf]
    %v211 = vld [vmem:[#allocation5 + $0x1ec] sm:$0xf]
    %v212 = vld [vmem:[#allocation5 + $0x1f0] sm:$0xf]
    %v213 = vld [vmem:[#allocation5 + $0x1f4] sm:$0xf]
    %v214 = vld [vmem:[#allocation5 + $0x1f8] sm:$0xf]
    %v215 = vld [vmem:[#allocation5 + $0x1fc] sm:$0xf]
    %v216 = vld [vmem:[%s2] sm:$0x1]
    %v218 = vlaneseq
    %v219 = vshrl.u32 %v218, 7
    %v220 = vsub.s32 0, %v219
    %v221 = vrot.slane %v216, %v220
    %v227 = vunpack.c.l.b16 %v84
    %v228 = vunpack.c.h.b16 %v84
    %v229 = vunpack.c.l.b16 %v85
    %v230 = vunpack.c.h.b16 %v85
    %v231 = vunpack.c.l.b16 %v86
    %v232 = vunpack.c.h.b16 %v86
    %v233 = vunpack.c.l.b16 %v87
    %v234 = vunpack.c.h.b16 %v87
    %v235 = vpack.c.b16 %v227, %v227
    %v236 = vpack.c.b16 %v228, %v228
    %v237 = vpack.c.b16 %v229, %v229
    %v238 = vpack.c.b16 %v230, %v230
    %v239 = vpack.c.b16 %v231, %v231
    %v240 = vpack.c.b16 %v232, %v232
    %v241 = vpack.c.b16 %v233, %v233
    %v242 = vpack.c.b16 %v234, %v234
    %v379 = vunpack.c.l.b16 %v88
    %v380 = vunpack.c.l.b16 %v89
    %v381 = vunpack.c.l.b16 %v90
    %v382 = vunpack.c.l.b16 %v91
    %v383 = vunpack.c.l.b16 %v92
    %v384 = vunpack.c.l.b16 %v93
    %v385 = vunpack.c.l.b16 %v94
    %v386 = vunpack.c.l.b16 %v95
    %v387 = vunpack.c.l.b16 %v96
    %v388 = vunpack.c.l.b16 %v97
    %v389 = vunpack.c.l.b16 %v98
    %v390 = vunpack.c.l.b16 %v99
    %v391 = vunpack.c.l.b16 %v100
    %v392 = vunpack.c.l.b16 %v101
    %v393 = vunpack.c.l.b16 %v102
    %v394 = vunpack.c.l.b16 %v103
    %v395 = vunpack.c.l.b16 %v104
    %v396 = vunpack.c.l.b16 %v105
    %v397 = vunpack.c.l.b16 %v106
    %v398 = vunpack.c.l.b16 %v107
    %v399 = vunpack.c.l.b16 %v108
    %v400 = vunpack.c.l.b16 %v109
    %v401 = vunpack.c.l.b16 %v110
    %v402 = vunpack.c.l.b16 %v111
    %v403 = vunpack.c.l.b16 %v112
    %v404 = vunpack.c.l.b16 %v113
    %v405 = vunpack.c.l.b16 %v114
    %v406 = vunpack.c.l.b16 %v115
    %v407 = vunpack.c.l.b16 %v116
    %v408 = vunpack.c.l.b16 %v117
    %v409 = vunpack.c.l.b16 %v118
    %v410 = vunpack.c.l.b16 %v119
    %v411 = vunpack.c.l.b16 %v120
    %v412 = vunpack.c.l.b16 %v121
    %v413 = vunpack.c.l.b16 %v122
    %v414 = vunpack.c.l.b16 %v123
    %v415 = vunpack.c.l.b16 %v124
    %v416 = vunpack.c.l.b16 %v125
    %v417 = vunpack.c.l.b16 %v126
    %v418 = vunpack.c.l.b16 %v127
    %v419 = vunpack.c.l.b16 %v128
    %v420 = vunpack.c.l.b16 %v129
    %v421 = vunpack.c.l.b16 %v130
    %v422 = vunpack.c.l.b16 %v131
    %v423 = vunpack.c.l.b16 %v132
    %v424 = vunpack.c.l.b16 %v133
    %v425 = vunpack.c.l.b16 %v134
    %v426 = vunpack.c.l.b16 %v135
    %v427 = vunpack.c.l.b16 %v136
    %v428 = vunpack.c.l.b16 %v137
    %v429 = vunpack.c.l.b16 %v138
    %v430 = vunpack.c.l.b16 %v139
    %v431 = vunpack.c.l.b16 %v140
    %v432 = vunpack.c.l.b16 %v141
    %v433 = vunpack.c.l.b16 %v142
    %v434 = vunpack.c.l.b16 %v143
    %v435 = vunpack.c.l.b16 %v144
    %v436 = vunpack.c.l.b16 %v145
    %v437 = vunpack.c.l.b16 %v146
    %v438 = vunpack.c.l.b16 %v147
    %v439 = vunpack.c.l.b16 %v148
    %v440 = vunpack.c.l.b16 %v149
    %v441 = vunpack.c.l.b16 %v150
    %v442 = vunpack.c.l.b16 %v151
    %v443 = vunpack.c.l.b16 %v152
    %v444 = vunpack.c.l.b16 %v153
    %v445 = vunpack.c.l.b16 %v154
    %v446 = vunpack.c.l.b16 %v155
    %v447 = vunpack.c.l.b16 %v156
    %v448 = vunpack.c.l.b16 %v157
    %v449 = vunpack.c.l.b16 %v158
    %v450 = vunpack.c.l.b16 %v159
    %v451 = vunpack.c.l.b16 %v160
    %v452 = vunpack.c.l.b16 %v161
    %v453 = vunpack.c.l.b16 %v162
    %v454 = vunpack.c.l.b16 %v163
    %v455 = vunpack.c.l.b16 %v164
    %v456 = vunpack.c.l.b16 %v165
    %v457 = vunpack.c.l.b16 %v166
    %v458 = vunpack.c.l.b16 %v167
    %v459 = vunpack.c.l.b16 %v168
    %v460 = vunpack.c.l.b16 %v169
    %v461 = vunpack.c.l.b16 %v170
    %v462 = vunpack.c.l.b16 %v171
    %v463 = vunpack.c.l.b16 %v172
    %v464 = vunpack.c.l.b16 %v173
    %v465 = vunpack.c.l.b16 %v174
    %v466 = vunpack.c.l.b16 %v175
    %v467 = vunpack.c.l.b16 %v176
    %v468 = vunpack.c.l.b16 %v177
    %v469 = vunpack.c.l.b16 %v178
    %v470 = vunpack.c.l.b16 %v179
    %v471 = vunpack.c.l.b16 %v180
    %v472 = vunpack.c.l.b16 %v181
    %v473 = vunpack.c.l.b16 %v182
    %v474 = vunpack.c.l.b16 %v183
    %v475 = vunpack.c.l.b16 %v184
    %v476 = vunpack.c.l.b16 %v185
    %v477 = vunpack.c.l.b16 %v186
    %v478 = vunpack.c.l.b16 %v187
    %v479 = vunpack.c.l.b16 %v188
    %v480 = vunpack.c.l.b16 %v189
    %v481 = vunpack.c.l.b16 %v190
    %v482 = vunpack.c.l.b16 %v191
    %v483 = vunpack.c.l.b16 %v192
    %v484 = vunpack.c.l.b16 %v193
    %v485 = vunpack.c.l.b16 %v194
    %v486 = vunpack.c.l.b16 %v195
    %v487 = vunpack.c.l.b16 %v196
    %v488 = vunpack.c.l.b16 %v197
    %v489 = vunpack.c.l.b16 %v198
    %v490 = vunpack.c.l.b16 %v199
    %v491 = vunpack.c.l.b16 %v200
    %v492 = vunpack.c.l.b16 %v201
    %v493 = vunpack.c.l.b16 %v202
    %v494 = vunpack.c.l.b16 %v203
    %v495 = vunpack.c.l.b16 %v204
    %v496 = vunpack.c.l.b16 %v205
    %v497 = vunpack.c.l.b16 %v206
    %v498 = vunpack.c.l.b16 %v207
    %v499 = vunpack.c.l.b16 %v208
    %v500 = vunpack.c.l.b16 %v209
    %v501 = vunpack.c.l.b16 %v210
    %v502 = vunpack.c.l.b16 %v211
    %v503 = vunpack.c.l.b16 %v212
    %v504 = vunpack.c.l.b16 %v213
    %v505 = vunpack.c.l.b16 %v214
    %v506 = vunpack.c.l.b16 %v215
    %v507 = vpack.c.b16 %v380, %v379
    %v508 = vpack.c.b16 %v382, %v381
    %v509 = vpack.c.b16 %v384, %v383
    %v510 = vpack.c.b16 %v386, %v385
    %v511 = vpack.c.b16 %v388, %v387
    %v512 = vpack.c.b16 %v390, %v389
    %v513 = vpack.c.b16 %v392, %v391
    %v514 = vpack.c.b16 %v394, %v393
    %v515 = vpack.c.b16 %v396, %v395
    %v516 = vpack.c.b16 %v398, %v397
    %v517 = vpack.c.b16 %v400, %v399
    %v518 = vpack.c.b16 %v402, %v401
    %v519 = vpack.c.b16 %v404, %v403
    %v520 = vpack.c.b16 %v406, %v405
    %v521 = vpack.c.b16 %v408, %v407
    %v522 = vpack.c.b16 %v410, %v409
    %v523 = vpack.c.b16 %v412, %v411
    %v524 = vpack.c.b16 %v414, %v413
    %v525 = vpack.c.b16 %v416, %v415
    %v526 = vpack.c.b16 %v418, %v417
    %v527 = vpack.c.b16 %v420, %v419
    %v528 = vpack.c.b16 %v422, %v421
    %v529 = vpack.c.b16 %v424, %v423
    %v530 = vpack.c.b16 %v426, %v425
    %v531 = vpack.c.b16 %v428, %v427
    %v532 = vpack.c.b16 %v430, %v429
    %v533 = vpack.c.b16 %v432, %v431
    %v534 = vpack.c.b16 %v434, %v433
    %v535 = vpack.c.b16 %v436, %v435
    %v536 = vpack.c.b16 %v438, %v437
    %v537 = vpack.c.b16 %v440, %v439
    %v538 = vpack.c.b16 %v442, %v441
    %v539 = vpack.c.b16 %v444, %v443
    %v540 = vpack.c.b16 %v446, %v445
    %v541 = vpack.c.b16 %v448, %v447
    %v542 = vpack.c.b16 %v450, %v449
    %v543 = vpack.c.b16 %v452, %v451
    %v544 = vpack.c.b16 %v454, %v453
    %v545 = vpack.c.b16 %v456, %v455
    %v546 = vpack.c.b16 %v458, %v457
    %v547 = vpack.c.b16 %v460, %v459
    %v548 = vpack.c.b16 %v462, %v461
    %v549 = vpack.c.b16 %v464, %v463
    %v550 = vpack.c.b16 %v466, %v465
    %v551 = vpack.c.b16 %v468, %v467
    %v552 = vpack.c.b16 %v470, %v469
    %v553 = vpack.c.b16 %v472, %v471
    %v554 = vpack.c.b16 %v474, %v473
    %v555 = vpack.c.b16 %v476, %v475
    %v556 = vpack.c.b16 %v478, %v477
    %v557 = vpack.c.b16 %v480, %v479
    %v558 = vpack.c.b16 %v482, %v481
    %v559 = vpack.c.b16 %v484, %v483
    %v560 = vpack.c.b16 %v486, %v485
    %v561 = vpack.c.b16 %v488, %v487
    %v562 = vpack.c.b16 %v490, %v489
    %v563 = vpack.c.b16 %v492, %v491
    %v564 = vpack.c.b16 %v494, %v493
    %v565 = vpack.c.b16 %v496, %v495
    %v566 = vpack.c.b16 %v498, %v497
    %v567 = vpack.c.b16 %v500, %v499
    %v568 = vpack.c.b16 %v502, %v501
    %v569 = vpack.c.b16 %v504, %v503
    %v570 = vpack.c.b16 %v506, %v505
    %635 = vmatprep.subr.bf16.mxu0 0
    %636 = vmatpush1.bf16.msra.mxu0 %v507
    %637 = vmatprep.subr.bf16.mxu0 0
    %638 = vmatpush1.bf16.msra.mxu0 %v508
    %639 = vmatprep.subr.bf16.mxu0 0
    %640 = vmatpush1.bf16.msra.mxu0 %v509
    %641 = vmatprep.subr.bf16.mxu0 0
    %642 = vmatpush1.bf16.msra.mxu0 %v510
    %643 = vmatprep.subr.bf16.mxu0 0
    %644 = vmatpush1.bf16.msra.mxu0 %v511
    %645 = vmatprep.subr.bf16.mxu0 0
    %646 = vmatpush1.bf16.msra.mxu0 %v512
    %647 = vmatprep.subr.bf16.mxu0 0
    %648 = vmatpush1.bf16.msra.mxu0 %v513
    %649 = vmatprep.subr.bf16.mxu0 0
    %650 = vmatpush1.bf16.msra.mxu0 %v514
    %651 = vmatprep.subr.bf16.mxu0 0
    %652 = vmatpush1.bf16.msra.mxu0 %v515
    %653 = vmatprep.subr.bf16.mxu0 0
    %654 = vmatpush1.bf16.msra.mxu0 %v516
    %655 = vmatprep.subr.bf16.mxu0 0
    %656 = vmatpush1.bf16.msra.mxu0 %v517
    %657 = vmatprep.subr.bf16.mxu0 0
    %658 = vmatpush1.bf16.msra.mxu0 %v518
    %659 = vmatprep.subr.bf16.mxu0 0
    %660 = vmatpush1.bf16.msra.mxu0 %v519
    %661 = vmatprep.subr.bf16.mxu0 0
    %662 = vmatpush1.bf16.msra.mxu0 %v520
    %663 = vmatprep.subr.bf16.mxu0 0
    %664 = vmatpush1.bf16.msra.mxu0 %v521
    %665 = vmatprep.subr.bf16.mxu0 0
    %666 = vmatpush1.bf16.msra.mxu0 %v522
    %667 = vmatprep.mubr.bf16.mxu0 %v236
    %668 = vmatmul.mubr.bf16.gmra.mrb[0].mxu0 %v235
    %v669 = vpop.f32.mrb[0].mxu0
    %v670 = vadd.f32 %v221, %v669
    %v671 = vpop.f32.mrb[0].mxu0
    %v672 = vpop.f32.mrb[0].mxu0
    %v673 = vpop.f32.mrb[0].mxu0
    %674 = vdwg.mxu0
    %675 = vmatprep.subr.bf16.mxu0 0
    %676 = vmatpush1.bf16.msra.mxu0 %v523
    %677 = vmatprep.subr.bf16.mxu0 0
    %678 = vmatpush1.bf16.msra.mxu0 %v524
    %679 = vmatprep.subr.bf16.mxu0 0
    %680 = vmatpush1.bf16.msra.mxu0 %v525
    %681 = vmatprep.subr.bf16.mxu0 0
    %682 = vmatpush1.bf16.msra.mxu0 %v526
    %683 = vmatprep.subr.bf16.mxu0 0
    %684 = vmatpush1.bf16.msra.mxu0 %v527
    %685 = vmatprep.subr.bf16.mxu0 0
    %686 = vmatpush1.bf16.msra.mxu0 %v528
    %687 = vmatprep.subr.bf16.mxu0 0
    %688 = vmatpush1.bf16.msra.mxu0 %v529
    %689 = vmatprep.subr.bf16.mxu0 0
    %690 = vmatpush1.bf16.msra.mxu0 %v530
    %691 = vmatprep.subr.bf16.mxu0 0
    %692 = vmatpush1.bf16.msra.mxu0 %v531
    %693 = vmatprep.subr.bf16.mxu0 0
    %694 = vmatpush1.bf16.msra.mxu0 %v532
    %695 = vmatprep.subr.bf16.mxu0 0
    %696 = vmatpush1.bf16.msra.mxu0 %v533
    %697 = vmatprep.subr.bf16.mxu0 0
    %698 = vmatpush1.bf16.msra.mxu0 %v534
    %699 = vmatprep.subr.bf16.mxu0 0
    %700 = vmatpush1.bf16.msra.mxu0 %v535
    %701 = vmatprep.subr.bf16.mxu0 0
    %702 = vmatpush1.bf16.msra.mxu0 %v536
    %703 = vmatprep.subr.bf16.mxu0 0
    %704 = vmatpush1.bf16.msra.mxu0 %v537
    %705 = vmatprep.subr.bf16.mxu0 0
    %706 = vmatpush1.bf16.msra.mxu0 %v538
    %707 = vmatprep.mubr.bf16.mxu0 %v238
    %708 = vmatmul.mubr.bf16.gmra.mrb[0].mxu0 %v237
    %v709 = vpop.f32.mrb[0].mxu0
    %v710 = vadd.f32 %v670, %v709
    %v711 = vpop.f32.mrb[0].mxu0
    %v712 = vpop.f32.mrb[0].mxu0
    %v713 = vpop.f32.mrb[0].mxu0
    %714 = vdwg.mxu0
    %715 = vmatprep.subr.bf16.mxu0 0
    %716 = vmatpush1.bf16.msra.mxu0 %v539
    %717 = vmatprep.subr.bf16.mxu0 0
    %718 = vmatpush1.bf16.msra.mxu0 %v540
    %719 = vmatprep.subr.bf16.mxu0 0
    %720 = vmatpush1.bf16.msra.mxu0 %v541
    %721 = vmatprep.subr.bf16.mxu0 0
    %722 = vmatpush1.bf16.msra.mxu0 %v542
    %723 = vmatprep.subr.bf16.mxu0 0
    %724 = vmatpush1.bf16.msra.mxu0 %v543
    %725 = vmatprep.subr.bf16.mxu0 0
    %726 = vmatpush1.bf16.msra.mxu0 %v544
    %727 = vmatprep.subr.bf16.mxu0 0
    %728 = vmatpush1.bf16.msra.mxu0 %v545
    %729 = vmatprep.subr.bf16.mxu0 0
    %730 = vmatpush1.bf16.msra.mxu0 %v546
    %731 = vmatprep.subr.bf16.mxu0 0
    %732 = vmatpush1.bf16.msra.mxu0 %v547
    %733 = vmatprep.subr.bf16.mxu0 0
    %734 = vmatpush1.bf16.msra.mxu0 %v548
    %735 = vmatprep.subr.bf16.mxu0 0
    %736 = vmatpush1.bf16.msra.mxu0 %v549
    %737 = vmatprep.subr.bf16.mxu0 0
    %738 = vmatpush1.bf16.msra.mxu0 %v550
    %739 = vmatprep.subr.bf16.mxu0 0
    %740 = vmatpush1.bf16.msra.mxu0 %v551
    %741 = vmatprep.subr.bf16.mxu0 0
    %742 = vmatpush1.bf16.msra.mxu0 %v552
    %743 = vmatprep.subr.bf16.mxu0 0
    %744 = vmatpush1.bf16.msra.mxu0 %v553
    %745 = vmatprep.subr.bf16.mxu0 0
    %746 = vmatpush1.bf16.msra.mxu0 %v554
    %747 = vmatprep.mubr.bf16.mxu0 %v240
    %748 = vmatmul.mubr.bf16.gmra.mrb[0].mxu0 %v239
    %v749 = vpop.f32.mrb[0].mxu0
    %v750 = vadd.f32 %v710, %v749
    %v751 = vpop.f32.mrb[0].mxu0
    %v752 = vpop.f32.mrb[0].mxu0
    %v753 = vpop.f32.mrb[0].mxu0
    %754 = vdwg.mxu0
    %755 = vmatprep.subr.bf16.mxu0 0
    %756 = vmatpush1.bf16.msra.mxu0 %v555
    %757 = vmatprep.subr.bf16.mxu0 0
    %758 = vmatpush1.bf16.msra.mxu0 %v556
    %759 = vmatprep.subr.bf16.mxu0 0
    %760 = vmatpush1.bf16.msra.mxu0 %v557
    %761 = vmatprep.subr.bf16.mxu0 0
    %762 = vmatpush1.bf16.msra.mxu0 %v558
    %763 = vmatprep.subr.bf16.mxu0 0
    %764 = vmatpush1.bf16.msra.mxu0 %v559
    %765 = vmatprep.subr.bf16.mxu0 0
    %766 = vmatpush1.bf16.msra.mxu0 %v560
    %767 = vmatprep.subr.bf16.mxu0 0
    %768 = vmatpush1.bf16.msra.mxu0 %v561
    %769 = vmatprep.subr.bf16.mxu0 0
    %770 = vmatpush1.bf16.msra.mxu0 %v562
    %771 = vmatprep.subr.bf16.mxu0 0
    %772 = vmatpush1.bf16.msra.mxu0 %v563
    %773 = vmatprep.subr.bf16.mxu0 0
    %774 = vmatpush1.bf16.msra.mxu0 %v564
    %775 = vmatprep.subr.bf16.mxu0 0
    %776 = vmatpush1.bf16.msra.mxu0 %v565
    %777 = vmatprep.subr.bf16.mxu0 0
    %778 = vmatpush1.bf16.msra.mxu0 %v566
    %779 = vmatprep.subr.bf16.mxu0 0
    %780 = vmatpush1.bf16.msra.mxu0 %v567
    %781 = vmatprep.subr.bf16.mxu0 0
    %782 = vmatpush1.bf16.msra.mxu0 %v568
    %783 = vmatprep.subr.bf16.mxu0 0
    %784 = vmatpush1.bf16.msra.mxu0 %v569
    %785 = vmatprep.subr.bf16.mxu0 0
    %786 = vmatpush1.bf16.msra.mxu0 %v570
    %787 = vmatprep.mubr.bf16.mxu0 %v242
    %788 = vmatmul.mubr.bf16.gmra.mrb[0].mxu0 %v241
    %v789 = vpop.f32.mrb[0].mxu0
    %v790 = vadd.f32 %v750, %v789
    %v791 = vpop.f32.mrb[0].mxu0
    %v792 = vpop.f32.mrb[0].mxu0
    %v793 = vpop.f32.mrb[0].mxu0
    %794 = vdwg.mxu0
    %v795 = vmax.f32 %v790, 0.0
    %v796 = vpack.c.bf16 %v795, %v795
    %v797 = vld [vmem:[#allocation7] sm:$0xf]
    %v798 = vld [vmem:[#allocation7 + $0x4] sm:$0xf]
    %v799 = vld [vmem:[#allocation7 + $0x8] sm:$0xf]
    %v800 = vld [vmem:[#allocation7 + $0xc] sm:$0xf]
    %v801 = vld [vmem:[#allocation7 + $0x10] sm:$0xf]
    %v802 = vld [vmem:[#allocation7 + $0x14] sm:$0xf]
    %v803 = vld [vmem:[#allocation7 + $0x18] sm:$0xf]
    %v804 = vld [vmem:[#allocation7 + $0x1c] sm:$0xf]
    %v805 = vld [vmem:[#allocation7 + $0x20] sm:$0xf]
    %v806 = vld [vmem:[#allocation7 + $0x24] sm:$0xf]
    %v807 = vld [vmem:[#allocation7 + $0x28] sm:$0xf]
    %v808 = vld [vmem:[#allocation7 + $0x2c] sm:$0xf]
    %v809 = vld [vmem:[#allocation7 + $0x30] sm:$0xf]
    %v810 = vld [vmem:[#allocation7 + $0x34] sm:$0xf]
    %v811 = vld [vmem:[#allocation7 + $0x38] sm:$0xf]
    %v812 = vld [vmem:[#allocation7 + $0x3c] sm:$0xf]
    %v813 = vld [vmem:[%s4] sm:$0x1]
    %v815 = vlaneseq
    %v816 = vshrl.u32 %v815, 7
    %v817 = vsub.s32 0, %v816
    %v818 = vrot.slane %v813, %v817
    %v836 = vunpack.c.l.b16 %v797
    %v837 = vunpack.c.l.b16 %v798
    %v838 = vunpack.c.l.b16 %v799
    %v839 = vunpack.c.l.b16 %v800
    %v840 = vunpack.c.l.b16 %v801
    %v841 = vunpack.c.l.b16 %v802
    %v842 = vunpack.c.l.b16 %v803
    %v843 = vunpack.c.l.b16 %v804
    %v844 = vunpack.c.l.b16 %v805
    %v845 = vunpack.c.l.b16 %v806
    %v846 = vunpack.c.l.b16 %v807
    %v847 = vunpack.c.l.b16 %v808
    %v848 = vunpack.c.l.b16 %v809
    %v849 = vunpack.c.l.b16 %v810
    %v850 = vunpack.c.l.b16 %v811
    %v851 = vunpack.c.l.b16 %v812
    %v852 = vpack.c.b16 %v837, %v836
    %v853 = vpack.c.b16 %v839, %v838
    %v854 = vpack.c.b16 %v841, %v840
    %v855 = vpack.c.b16 %v843, %v842
    %v856 = vpack.c.b16 %v845, %v844
    %v857 = vpack.c.b16 %v847, %v846
    %v858 = vpack.c.b16 %v849, %v848
    %v859 = vpack.c.b16 %v851, %v850
    %868 = vmatprep.subr.bf16.mxu0 0
    %869 = vmatpush1.bf16.msra.mxu0 %v852
    %870 = vmatprep.subr.bf16.mxu0 0
    %871 = vmatpush1.bf16.msra.mxu0 %v853
    %872 = vmatprep.subr.bf16.mxu0 0
    %873 = vmatpush1.bf16.msra.mxu0 %v854
    %874 = vmatprep.subr.bf16.mxu0 0
    %875 = vmatpush1.bf16.msra.mxu0 %v855
    %876 = vmatprep.subr.bf16.mxu0 0
    %877 = vmatpush1.bf16.msra.mxu0 %v856
    %878 = vmatprep.subr.bf16.mxu0 0
    %879 = vmatpush1.bf16.msra.mxu0 %v857
    %880 = vmatprep.subr.bf16.mxu0 0
    %881 = vmatpush1.bf16.msra.mxu0 %v858
    %882 = vmatprep.subr.bf16.mxu0 0
    %883 = vmatpush1.bf16.msra.mxu0 %v859
    %884 = vmatprep.subr.bf16.mxu0 0
    %885 = vmatpush1.bf16.msra.mxu0 0
    %886 = vmatprep.subr.bf16.mxu0 0
    %887 = vmatpush1.bf16.msra.mxu0 0
    %888 = vmatprep.subr.bf16.mxu0 0
    %889 = vmatpush1.bf16.msra.mxu0 0
    %890 = vmatprep.subr.bf16.mxu0 0
    %891 = vmatpush1.bf16.msra.mxu0 0
    %892 = vmatprep.subr.bf16.mxu0 0
    %893 = vmatpush1.bf16.msra.mxu0 0
    %894 = vmatprep.subr.bf16.mxu0 0
    %895 = vmatpush1.bf16.msra.mxu0 0
    %896 = vmatprep.subr.bf16.mxu0 0
    %897 = vmatpush1.bf16.msra.mxu0 0
    %898 = vmatprep.subr.bf16.mxu0 0
    %899 = vmatpush1.bf16.msra.mxu0 0
    %900 = vmatprep.mubr.bf16.mxu0 0
    %901 = vmatmul.mubr.bf16.gmra.mrb[0].mxu0 %v796
    %v902 = vpop.f32.mrb[0].mxu0
    %v903 = vadd.f32 %v818, %v902
    %v904 = vpop.f32.mrb[0].mxu0
    %v905 = vpop.f32.mrb[0].mxu0
    %v906 = vpop.f32.mrb[0].mxu0
    %907 = vdwg.mxu0
    %v908 = vmax.f32 %v903, 0.0
    %v909 = vpack.c.bf16 %v908, %v908
    %910 = vst [vmem:[#allocation11] sm:$0xff] %v908
    %v911 = vld [vmem:[#allocation8] sm:$0xf]
    %v912 = vld [vmem:[#allocation8 + $0x4] sm:$0xf]
    %v913 = vld [vmem:[#allocation8 + $0x8] sm:$0xf]
    %v914 = vld [vmem:[#allocation8 + $0xc] sm:$0xf]
    %v915 = vld [vmem:[#allocation8 + $0x10] sm:$0xf]
    %v916 = vld [vmem:[#allocation8 + $0x14] sm:$0xf]
    %v917 = vld [vmem:[#allocation8 + $0x18] sm:$0xf]
    %v918 = vld [vmem:[#allocation8 + $0x1c] sm:$0xf]
    %v919 = vld [vmem:[#allocation8 + $0x20] sm:$0xf]
    %v920 = vld [vmem:[#allocation8 + $0x24] sm:$0xf]
    %v921 = vld [vmem:[#allocation8 + $0x28] sm:$0xf]
    %v922 = vld [vmem:[#allocation8 + $0x2c] sm:$0xf]
    %v923 = vld [vmem:[#allocation8 + $0x30] sm:$0xf]
    %v924 = vld [vmem:[#allocation8 + $0x34] sm:$0xf]
    %v925 = vld [vmem:[#allocation8 + $0x38] sm:$0xf]
    %v926 = vld [vmem:[#allocation8 + $0x3c] sm:$0xf]
    %v927 = vld [vmem:[%s6] sm:$0x1]
    %v929 = vlaneseq
    %v930 = vshrl.u32 %v929, 7
    %v931 = vsub.s32 0, %v930
    %v932 = vrot.slane %v927, %v931
    %v950 = vunpack.c.l.b16 %v911
    %v951 = vunpack.c.l.b16 %v912
    %v952 = vunpack.c.l.b16 %v913
    %v953 = vunpack.c.l.b16 %v914
    %v954 = vunpack.c.l.b16 %v915
    %v955 = vunpack.c.l.b16 %v916
    %v956 = vunpack.c.l.b16 %v917
    %v957 = vunpack.c.l.b16 %v918
    %v958 = vunpack.c.l.b16 %v919
    %v959 = vunpack.c.l.b16 %v920
    %v960 = vunpack.c.l.b16 %v921
    %v961 = vunpack.c.l.b16 %v922
    %v962 = vunpack.c.l.b16 %v923
    %v963 = vunpack.c.l.b16 %v924
    %v964 = vunpack.c.l.b16 %v925
    %v965 = vunpack.c.l.b16 %v926
    %v966 = vpack.c.b16 %v951, %v950
    %v967 = vpack.c.b16 %v953, %v952
    %v968 = vpack.c.b16 %v955, %v954
    %v969 = vpack.c.b16 %v957, %v956
    %v970 = vpack.c.b16 %v959, %v958
    %v971 = vpack.c.b16 %v961, %v960
    %v972 = vpack.c.b16 %v963, %v962
    %v973 = vpack.c.b16 %v965, %v964
    %982 = vmatprep.subr.bf16.mxu0 0
    %983 = vmatpush1.bf16.msra.mxu0 %v966
    %984 = vmatprep.subr.bf16.mxu0 0
    %985 = vmatpush1.bf16.msra.mxu0 %v967
    %986 = vmatprep.subr.bf16.mxu0 0
    %987 = vmatpush1.bf16.msra.mxu0 %v968
    %988 = vmatprep.subr.bf16.mxu0 0
    %989 = vmatpush1.bf16.msra.mxu0 %v969
    %990 = vmatprep.subr.bf16.mxu0 0
    %991 = vmatpush1.bf16.msra.mxu0 %v970
    %992 = vmatprep.subr.bf16.mxu0 0
    %993 = vmatpush1.bf16.msra.mxu0 %v971
    %994 = vmatprep.subr.bf16.mxu0 0
    %995 = vmatpush1.bf16.msra.mxu0 %v972
    %996 = vmatprep.subr.bf16.mxu0 0
    %997 = vmatpush1.bf16.msra.mxu0 %v973
    %998 = vmatprep.subr.bf16.mxu0 0
    %999 = vmatpush1.bf16.msra.mxu0 0
    %1000 = vmatprep.subr.bf16.mxu0 0
    %1001 = vmatpush1.bf16.msra.mxu0 0
    %1002 = vmatprep.subr.bf16.mxu0 0
    %1003 = vmatpush1.bf16.msra.mxu0 0
    %1004 = vmatprep.subr.bf16.mxu0 0
    %1005 = vmatpush1.bf16.msra.mxu0 0
    %1006 = vmatprep.subr.bf16.mxu0 0
    %1007 = vmatpush1.bf16.msra.mxu0 0
    %1008 = vmatprep.subr.bf16.mxu0 0
    %1009 = vmatpush1.bf16.msra.mxu0 0
    %1010 = vmatprep.subr.bf16.mxu0 0
    %1011 = vmatpush1.bf16.msra.mxu0 0
    %1012 = vmatprep.subr.bf16.mxu0 0
    %1013 = vmatpush1.bf16.msra.mxu0 0
    %1014 = vmatprep.mubr.bf16.mxu0 0
    %1015 = vmatmul.mubr.bf16.gmra.mrb[0].mxu0 %v909
    %v1016 = vpop.f32.mrb[0].mxu0
    %v1017 = vadd.f32 %v932, %v1016
    %v1018 = vpop.f32.mrb[0].mxu0
    %v1019 = vpop.f32.mrb[0].mxu0
    %v1020 = vpop.f32.mrb[0].mxu0
    %1021 = vdwg.mxu0
    %1022 = vst [vmem:[#allocation10] sm:$0xff] %v1017
    // Predicated region
    $region46: #{tpu_custom_call.1} parent=1 // pred_check
      _
    $region47: #{tpu_custom_call.1} parent=1 // pred_check_branch
      %1024 = sbr.rel (0) target = $region49
    $region48: #{tpu_custom_call.1} parent=1 // pred_region
      %s1026 = ssub.s32 128, 128
      %1027 = vsyncadd [#allocation4], %s1026
      %s1029 = sshll.u32 [#allocation10], 4
      %s1030 = int_to_ptr.vmem [resolvable:$true] %s1029
      %1032 = dma.vmem_to_hbm [thread:$0]  %s1030, 128, %s7, [#allocation4]
    $region49: #{tpu_custom_call.1} parent=1 // pred_fallthru
      _
    // Predicated region
    $region50: #{tpu_custom_call.1} parent=1 // pred_check
      _
    $region51: #{tpu_custom_call.1} parent=1 // pred_check_branch
      %1034 = sbr.rel (0) target = $region53
    $region52: #{tpu_custom_call.1} parent=1 // pred_region
      %s1036 = ssub.s32 128, 128
      %1037 = vsyncadd [#allocation12], %s1036
      %s1039 = sshll.u32 [#allocation11], 4
      %s1040 = int_to_ptr.vmem [resolvable:$true] %s1039
      %1042 = dma.vmem_to_hbm [thread:$0]  %s1040, 128, %s8, [#allocation12]
    $region53: #{tpu_custom_call.1} parent=1 // pred_fallthru
      _
    // Predicated region
    $region54: #{tpu_custom_call.1} parent=1 // pred_check
      _
    $region55: #{tpu_custom_call.1} parent=1 // pred_check_branch
      %1044 = sbr.rel (0) target = $region57
    $region56: #{tpu_custom_call.1} parent=1 // pred_region
      %1045 = dma.done [#allocation4], 128
    $region57: #{tpu_custom_call.1} parent=1 // pred_fallthru
      _
    // Predicated region
    $region58: #{tpu_custom_call.1} parent=1 // pred_check
      _
    $region59: #{tpu_custom_call.1} parent=1 // pred_check_branch
      %1047 = sbr.rel (0) target = $region61
    $region60: #{tpu_custom_call.1} parent=1 // pred_region
      %1048 = dma.done [#allocation12], 128
    $region61: #{tpu_custom_call.1} parent=1 // pred_fallthru
      _
    %1049 = vsyncpa [#allocation3], 1
    %1050 = vsyncpa [#allocation6], 1
    %1051 = vsyncpa [#allocation9], 1
    %1052 = vsyncpa [#allocation4], 1
    %1053 = vsyncpa [#allocation12], 1

</llo_original>
